<compile_context>
chip_gen: v6e
topology: v6e:2x2x1
jax: 0.10.0
libtpu: 0.0.40
codegen_flags: <defaults>
</compile_context>

<pallas_src>
import math
import jax
import jax.numpy as jnp
from jax.experimental import pallas as pl
from jax.experimental.pallas import tpu as pltpu


# ----------------------------------------------------------------------------
# Pallas kernel: pointwise KAN layer (spline basis + channel mix, all on VPU)
# ----------------------------------------------------------------------------
def _make_kan_kernel(knots, spline_order, cin, cout, gk, sub_rows, block_rows):
    """knots: static, uniformly spaced B-spline knots (python floats, len G+2K+1)."""
    g = tuple(float(v) for v in knots)
    n0 = len(g) - 1                     # number of order-0 bases
    assert n0 - spline_order == gk
    assert block_rows % sub_rows == 0
    n_sub = block_rows // sub_rows

    # Uniform grid (make_knots always produces one) -> fast recursion applies.
    h = g[1] - g[0]
    assert all(abs((g[i + 1] - g[i]) - h) < 1e-6 * max(1.0, abs(h)) for i in range(n0)), \
        "fast Cox-de Boor path requires a uniform knot grid"
    inv_h = 1.0 / h
    g0 = g[0]

    def kernel(w_ref, x_ref, o_ref):
        # w_ref: SMEM flat f32[(cout*cin) + (cout*cin*gk)]
        # x_ref: VMEM (cin, block_rows, 128)
        # o_ref: VMEM (cout, block_rows, 128)

        # Hoist all scalar weight reads (SMEM -> sregs) out of the hot loop.
        w_base = [[w_ref[co * cin + ci] for ci in range(cin)] for co in range(cout)]
        w_spl = [[[w_ref[cout * cin + (co * cin + ci) * gk + j] for j in range(gk)]
                  for ci in range(cin)] for co in range(cout)]

        def process(s):
            r0 = s * sub_rows
            if not isinstance(s, int):
                r0 = pl.multiple_of(r0, sub_rows)
            acc = [None] * cout
            for ci in range(cin):
                x = x_ref[ci, pl.ds(r0, sub_rows), :].astype(jnp.float32)

                # residual branch: silu(x)  (EUP sigmoid + VPU mul)
                silu = x * jax.nn.sigmoid(x)
                for co in range(cout):
                    t = w_base[co][ci] * silu
                    acc[co] = t if acc[co] is None else acc[co] + t

                # normalized coordinate on the uniform knot grid
                u = (x - g0) * inv_h
                f = jnp.floor(u)
                # order-0 bases: f == j  (out-of-range x -> all zeros, matching the
                # half-open band compares of efficient-KAN)
                bases = [(f == float(j)).astype(jnp.float32) for j in range(n0)]

                # uniform-knot Cox-de Boor: b'[j] = t_j*b[j] + (1 - t_{j+1})*b[j+1],
                # t_j = (u - j)/k.  No divides; each t_j shared by adjacent bases.
                for k in range(1, spline_order + 1):
                    inv_k = 1.0 / k
                    uk = u if k == 1 else u * inv_k
                    t = [uk] + [uk - (jj * inv_k) for jj in range(1, n0 - k + 1)]
                    omt = [None] + [1.0 - t[jj] for jj in range(1, n0 - k + 1)]
                    bases = [t[j] * bases[j] + omt[j + 1] * bases[j + 1]
                             for j in range(n0 - k)]

                # channel mix: scalar-broadcast FMAs (bases shared across cout)
                for co in range(cout):
                    a = acc[co]
                    for j in range(gk):
                        a = a + w_spl[co][ci][j] * bases[j]
                    acc[co] = a

            for co in range(cout):
                o_ref[co, pl.ds(r0, sub_rows), :] = acc[co].astype(o_ref.dtype)

        if n_sub == 1:
            process(0)
        elif n_sub % 2 == 0:
            # manual 2x unroll: lets the scheduler pack chunk s's stores under
            # chunk s+1's prologue without doubling basis-stage vreg pressure much
            def body2(s, carry):
                process(2 * s)
                process(2 * s + 1)
                return carry
            jax.lax.fori_loop(0, n_sub // 2, body2, 0)
        else:
            def body(s, carry):
                process(s)
                return carry
            jax.lax.fori_loop(0, n_sub, body, 0)

    return kernel


def _num_tensorcores_per_chip():
    """Best-effort megacore detection; default to 1 (no forced grid split)."""
    try:
        kind = jax.devices()[0].device_kind.lower()
    except Exception:
        return 1
    if ("lite" in kind) or ("v5e" in kind) or ("v6" in kind):
        return 1
    if ("v7" in kind) or ("v5p" in kind) or ("v4" in kind):
        return 2
    return 1


def _choose_block_rows(n_rows, num_tc):
    """Per-grid-step row count (rows of 128 lanes); multiple of 8."""
    rows8 = ((n_rows + 7) // 8) * 8
    tb = min(1024, rows8)
    if num_tc > 1 and rows8 >= 128:
        # Split only when megacore can use it; aim for ~4 steps per core while
        # keeping >=64-row blocks so the ~0.35us/step overhead stays amortized.
        target = max(64, -(-rows8 // (4 * num_tc)))
        target = ((target + 7) // 8) * 8
        tb = min(tb, target)
    return tb


def conv_sep_kan_layer(x1, base_w, spline_w, knots, spline_order):
    """One ConvSepKanLayer (pointwise KAN conv): (B, Cin, H, W) -> (B, Cout, H, W)."""
    B, Cin, H, W = x1.shape
    Cout, _, GK = spline_w.shape
    N = B * H * W

    n_rows = pl.cdiv(N, 128)
    num_tc = _num_tensorcores_per_chip()
    block_rows = _choose_block_rows(n_rows, num_tc)
    rows_pad = pl.cdiv(n_rows, block_rows) * block_rows
    n_pad = rows_pad * 128

    # NCHW -> (Cin, N) -> sublane/lane-dense (Cin, rows, 128)
    # TODO(synk): ragged tail could be handled in-kernel (masked last block) to
    # avoid the host-side pad/slice passes; kept simple since the whole layer is jitted.
    xf = jnp.transpose(x1, (1, 0, 2, 3)).reshape(Cin, N)
    if n_pad != N:
        xf = jnp.pad(xf, ((0, 0), (0, n_pad - N)))
    xr = xf.reshape(Cin, rows_pad, 128)

    # fused flat weights for SMEM: [base (Cout*Cin) | spline (Cout*Cin*GK)]
    w_flat = jnp.concatenate(
        [base_w.reshape(-1), spline_w.reshape(-1)]).astype(jnp.float32)

    sub_rows = 8   # conservative vreg pressure (bases + accs + temps << 64 vregs)
    kernel = _make_kan_kernel(knots, spline_order, Cin, Cout, GK,
                              sub_rows, block_rows)

    # VMEM budget: double-buffered input + output blocks (+ headroom), v7x-safe.
    need = 4 * 2 * (Cin + Cout) * block_rows * 128
    vmem_limit = int(min(max(2 * need, 4 << 20), 32 << 20))

    out = pl.pallas_call(
        kernel,
        out_shape=jax.ShapeDtypeStruct((Cout, rows_pad, 128), jnp.float32),
        grid=(rows_pad // block_rows,),
        in_specs=[
            pl.BlockSpec(memory_space=pltpu.MemorySpace.SMEM),          # weights
            pl.BlockSpec((Cin, block_rows, 128), lambda i: (0, i, 0)),  # x
        ],
        out_specs=pl.BlockSpec((Cout, block_rows, 128), lambda i: (0, i, 0)),
        compiler_params=pltpu.CompilerParams(
            dimension_semantics=("parallel",),
            vmem_limit_bytes=vmem_limit,
        ),
    )(w_flat, xr)

    y = out.reshape(Cout, n_pad)[:, :N].reshape(Cout, B, H, W)
    return jnp.transpose(y, (1, 0, 2, 3))


# ----------------------------------------------------------------------------
# Plain-JAX reference of the KAN layer (for a numerical self-check)
# ----------------------------------------------------------------------------
def _reference_kan_layer(x1, base_w, spline_w, knots, spline_order):
    B, Cin, H, W = x1.shape
    Cout, _, GK = spline_w.shape
    g = jnp.asarray(knots, jnp.float32)
    xf = jnp.transpose(x1, (0, 2, 3, 1)).reshape(-1, Cin)            # (N, Cin)
    xe = xf[:, :, None]                                              # (N, Cin, 1)
    bases = ((xe >= g[:-1]) & (xe < g[1:])).astype(jnp.float32)      # (N, Cin, n0)
    for k in range(1, spline_order + 1):
        left = (xe - g[:-(k + 1)]) / (g[k:-1] - g[:-(k + 1)]) * bases[..., :-1]
        right = (g[k + 1:] - xe) / (g[k + 1:] - g[1:-k]) * bases[..., 1:]
        bases = left + right
    silu = xf * jax.nn.sigmoid(xf)
    y = silu @ base_w.T + bases.reshape(xf.shape[0], -1) @ spline_w.reshape(Cout, -1).T
    y = y.reshape(B, H, W, Cout)
    return jnp.transpose(y, (0, 3, 1, 2))


# ----------------------------------------------------------------------------
# Plain-JAX glue: bilinear upsample (PyTorch align_corners=False) & pixel shuffle
# ----------------------------------------------------------------------------
def upsample_bilinear(x, scale):
    """x: (B, C, H, W) -> (B, C, H*scale, W*scale); matches F.interpolate(bilinear)."""
    B, C, H, W = x.shape
    OH, OW = H * scale, W * scale

    def src_idx(out_size, in_size):
        s = in_size / out_size
        src = (jnp.arange(out_size, dtype=jnp.float32) + 0.5) * s - 0.5
        src = jnp.maximum(src, 0.0)
        i0 = jnp.floor(src).astype(jnp.int32)
        i0 = jnp.minimum(i0, in_size - 1)
        i1 = jnp.minimum(i0 + 1, in_size - 1)
        frac = src - i0.astype(jnp.float32)
        return i0, i1, frac

    h0, h1, hf = src_idx(OH, H)
    w0, w1, wf = src_idx(OW, W)
    hf = hf[None, None, :, None]
    wf = wf[None, None, None, :]

    rows = x[:, :, h0, :] * (1.0 - hf) + x[:, :, h1, :] * hf          # (B, C, OH, W)
    out = rows[:, :, :, w0] * (1.0 - wf) + rows[:, :, :, w1] * wf     # (B, C, OH, OW)
    return out


def pixel_shuffle(x, r):
    """(B, C*r*r, H, W) -> (B, C, H*r, W*r), matching nn.PixelShuffle."""
    B, Crr, H, W = x.shape
    C = Crr // (r * r)
    x = x.reshape(B, C, r, r, H, W)
    x = jnp.transpose(x, (0, 1, 4, 2, 5, 3))
    return x.reshape(B, C, H * r, W * r)


# ----------------------------------------------------------------------------
# Module: parameters + forward
# ----------------------------------------------------------------------------
def make_knots(grid_size, spline_order, grid_range):
    h = (grid_range[1] - grid_range[0]) / grid_size
    return [grid_range[0] + (i - spline_order) * h
            for i in range(grid_size + 2 * spline_order + 1)]


def init_params(key, in_channels, out_channels, grid_size, spline_order, residual_std):
    params = []
    gk = grid_size + spline_order
    for cin, cout in zip(in_channels, out_channels):
        key, k1, k2 = jax.random.split(key, 3)
        bound = 1.0 / math.sqrt(cin)
        base_w = jax.random.uniform(k1, (cout, cin), jnp.float32, -bound, bound)
        spline_w = residual_std * jax.random.normal(k2, (cout, cin, gk), jnp.float32)
        params.append((base_w, spline_w))
    return params


def conv_sep_kan_forward(x, params, upscale, knots, spline_order):
    """x: (B, 3, H, W)  ->  (B, 3, H*upscale, W*upscale)  (NCHW, like PyTorch)."""
    cb = x[:, 1:2, :, :]
    cr = x[:, 2:, :, :]
    cb = upsample_bilinear(cb, upscale)
    cr = upsample_bilinear(cr, upscale)

    # NOTE: the PyTorch loop applies every layer to x[:, :1]; only the last
    # result survives — replicated faithfully here.
    y = None
    for base_w, spline_w in params:
        y = conv_sep_kan_layer(x[:, :1], base_w, spline_w, knots, spline_order)

    y = pixel_shuffle(y, upscale)
    return jnp.concatenate([y, cb, cr], axis=1)


if __name__ == "__main__":
    # Hyper-parameters consistent with the module's __init__
    upscale = 2
    grid_size = 5
    spline_order = 3
    residual_std = 0.1
    grid_range = (-1.0, 1.0)
    in_channels = [1]
    out_channels = [upscale * upscale]   # so that PixelShuffle -> 1 channel (Y)

    B, H, W = 2, 16, 16
    key = jax.random.PRNGKey(0)
    kx, kp = jax.random.split(key)
    x = jax.random.uniform(kx, (B, 3, H, W), dtype=jnp.float32)

    knots = make_knots(grid_size, spline_order, grid_range)
    params = init_params(kp, in_channels, out_channels, grid_size, spline_order, residual_std)

    # Numerical self-check of the Pallas KAN layer vs. a plain-JAX reference.
    bw, sw = params[0]
    y_kernel = conv_sep_kan_layer(x[:, :1], bw, sw, knots, spline_order)
    y_ref = _reference_kan_layer(x[:, :1], bw, sw, knots, spline_order)
    assert jnp.allclose(y_kernel, y_ref, atol=1e-4, rtol=1e-4), \
        float(jnp.max(jnp.abs(y_kernel - y_ref)))

    fwd = jax.jit(lambda xx, pp: conv_sep_kan_forward(xx, pp, upscale, knots, spline_order))
    out = jax.block_until_ready(fwd(x, params))
    assert out.shape == (B, 3, H * upscale, W * upscale), out.shape
    print("KERNEL_OK")
</pallas_src>

<mosaic_0001>
module attributes {stable_mosaic.version = 11 : i64} {
  func.func @kernel(%arg0: i32, %arg1: memref<36xf32, #tpu.memory_space<smem>>, %arg2: memref<1x8x128xf32, #tpu.memory_space<vmem>>, %arg3: memref<4x8x128xf32, #tpu.memory_space<vmem>>) attributes {dimension_semantics = [#tpu.dimension_semantics<parallel>], iteration_bounds = array<i64: 1>, scalar_prefetch = 0 : i64, scratch_operands = 0 : i64, tpu.core_type = #tpu.core_type<tc>, window_params = [{transform_indices = @transform_0, window_bounds = array<i64: 36>}, {transform_indices = @transform_1, window_bounds = array<i64: 1, 8, 128>}, {transform_indices = @transform_2, window_bounds = array<i64: 4, 8, 128>}]} {
    %c0 = arith.constant 0 : index
    %0 = memref.load %arg1[%c0] : memref<36xf32, #tpu.memory_space<smem>>
    %c1 = arith.constant 1 : index
    %1 = memref.load %arg1[%c1] : memref<36xf32, #tpu.memory_space<smem>>
    %c2 = arith.constant 2 : index
    %2 = memref.load %arg1[%c2] : memref<36xf32, #tpu.memory_space<smem>>
    %c3 = arith.constant 3 : index
    %3 = memref.load %arg1[%c3] : memref<36xf32, #tpu.memory_space<smem>>
    %c4 = arith.constant 4 : index
    %4 = memref.load %arg1[%c4] : memref<36xf32, #tpu.memory_space<smem>>
    %c5 = arith.constant 5 : index
    %5 = memref.load %arg1[%c5] : memref<36xf32, #tpu.memory_space<smem>>
    %c6 = arith.constant 6 : index
    %6 = memref.load %arg1[%c6] : memref<36xf32, #tpu.memory_space<smem>>
    %c7 = arith.constant 7 : index
    %7 = memref.load %arg1[%c7] : memref<36xf32, #tpu.memory_space<smem>>
    %c8 = arith.constant 8 : index
    %8 = memref.load %arg1[%c8] : memref<36xf32, #tpu.memory_space<smem>>
    %c9 = arith.constant 9 : index
    %9 = memref.load %arg1[%c9] : memref<36xf32, #tpu.memory_space<smem>>
    %c10 = arith.constant 10 : index
    %10 = memref.load %arg1[%c10] : memref<36xf32, #tpu.memory_space<smem>>
    %c11 = arith.constant 11 : index
    %11 = memref.load %arg1[%c11] : memref<36xf32, #tpu.memory_space<smem>>
    %c12 = arith.constant 12 : index
    %12 = memref.load %arg1[%c12] : memref<36xf32, #tpu.memory_space<smem>>
    %c13 = arith.constant 13 : index
    %13 = memref.load %arg1[%c13] : memref<36xf32, #tpu.memory_space<smem>>
    %c14 = arith.constant 14 : index
    %14 = memref.load %arg1[%c14] : memref<36xf32, #tpu.memory_space<smem>>
    %c15 = arith.constant 15 : index
    %15 = memref.load %arg1[%c15] : memref<36xf32, #tpu.memory_space<smem>>
    %c16 = arith.constant 16 : index
    %16 = memref.load %arg1[%c16] : memref<36xf32, #tpu.memory_space<smem>>
    %c17 = arith.constant 17 : index
    %17 = memref.load %arg1[%c17] : memref<36xf32, #tpu.memory_space<smem>>
    %c18 = arith.constant 18 : index
    %18 = memref.load %arg1[%c18] : memref<36xf32, #tpu.memory_space<smem>>
    %c19 = arith.constant 19 : index
    %19 = memref.load %arg1[%c19] : memref<36xf32, #tpu.memory_space<smem>>
    %c20 = arith.constant 20 : index
    %20 = memref.load %arg1[%c20] : memref<36xf32, #tpu.memory_space<smem>>
    %c21 = arith.constant 21 : index
    %21 = memref.load %arg1[%c21] : memref<36xf32, #tpu.memory_space<smem>>
    %c22 = arith.constant 22 : index
    %22 = memref.load %arg1[%c22] : memref<36xf32, #tpu.memory_space<smem>>
    %c23 = arith.constant 23 : index
    %23 = memref.load %arg1[%c23] : memref<36xf32, #tpu.memory_space<smem>>
    %c24 = arith.constant 24 : index
    %24 = memref.load %arg1[%c24] : memref<36xf32, #tpu.memory_space<smem>>
    %c25 = arith.constant 25 : index
    %25 = memref.load %arg1[%c25] : memref<36xf32, #tpu.memory_space<smem>>
    %c26 = arith.constant 26 : index
    %26 = memref.load %arg1[%c26] : memref<36xf32, #tpu.memory_space<smem>>
    %c27 = arith.constant 27 : index
    %27 = memref.load %arg1[%c27] : memref<36xf32, #tpu.memory_space<smem>>
    %c28 = arith.constant 28 : index
    %28 = memref.load %arg1[%c28] : memref<36xf32, #tpu.memory_space<smem>>
    %c29 = arith.constant 29 : index
    %29 = memref.load %arg1[%c29] : memref<36xf32, #tpu.memory_space<smem>>
    %c30 = arith.constant 30 : index
    %30 = memref.load %arg1[%c30] : memref<36xf32, #tpu.memory_space<smem>>
    %c31 = arith.constant 31 : index
    %31 = memref.load %arg1[%c31] : memref<36xf32, #tpu.memory_space<smem>>
    %c32 = arith.constant 32 : index
    %32 = memref.load %arg1[%c32] : memref<36xf32, #tpu.memory_space<smem>>
    %c33 = arith.constant 33 : index
    %33 = memref.load %arg1[%c33] : memref<36xf32, #tpu.memory_space<smem>>
    %c34 = arith.constant 34 : index
    %34 = memref.load %arg1[%c34] : memref<36xf32, #tpu.memory_space<smem>>
    %c35 = arith.constant 35 : index
    %35 = memref.load %arg1[%c35] : memref<36xf32, #tpu.memory_space<smem>>
    %c0_0 = arith.constant 0 : index
    %c0_1 = arith.constant 0 : index
    %c0_2 = arith.constant 0 : index
    %36 = vector.load %arg2[%c0_0, %c0_1, %c0_2] : memref<1x8x128xf32, #tpu.memory_space<vmem>>, vector<1x8x128xf32>
    %37 = vector.shape_cast %36 : vector<1x8x128xf32> to vector<8x128xf32>
    %38 = arith.negf %37 : vector<8x128xf32>
    %39 = math.exp %38 : vector<8x128xf32>
    %cst = arith.constant 1.000000e+00 : f32
    %40 = vector.broadcast %cst : f32 to vector<8x128xf32>
    %41 = arith.addf %40, %39 : vector<8x128xf32>
    %42 = arith.divf %40, %41 : vector<8x128xf32>
    %43 = arith.mulf %37, %42 : vector<8x128xf32>
    %44 = vector.broadcast %0 : f32 to vector<8x128xf32>
    %45 = arith.mulf %44, %43 : vector<8x128xf32>
    %46 = vector.broadcast %1 : f32 to vector<8x128xf32>
    %47 = arith.mulf %46, %43 : vector<8x128xf32>
    %48 = vector.broadcast %2 : f32 to vector<8x128xf32>
    %49 = arith.mulf %48, %43 : vector<8x128xf32>
    %50 = vector.broadcast %3 : f32 to vector<8x128xf32>
    %51 = arith.mulf %50, %43 : vector<8x128xf32>
    %cst_3 = arith.constant -2.200000e+00 : f32
    %52 = vector.broadcast %cst_3 : f32 to vector<8x128xf32>
    %53 = arith.subf %37, %52 : vector<8x128xf32>
    %cst_4 = arith.constant 2.500000e+00 : f32
    %54 = vector.broadcast %cst_4 : f32 to vector<8x128xf32>
    %55 = arith.mulf %53, %54 : vector<8x128xf32>
    %56 = math.floor %55 : vector<8x128xf32>
    %cst_5 = arith.constant 0.000000e+00 : f32
    %57 = vector.broadcast %cst_5 : f32 to vector<8x128xf32>
    %58 = arith.cmpf oeq, %56, %57 : vector<8x128xf32>
    %59 = arith.extui %58 : vector<8x128xi1> to vector<8x128xi32>
    %60 = arith.sitofp %59 : vector<8x128xi32> to vector<8x128xf32>
    %cst_6 = arith.constant 1.000000e+00 : f32
    %61 = vector.broadcast %cst_6 : f32 to vector<8x128xf32>
    %62 = arith.cmpf oeq, %56, %61 : vector<8x128xf32>
    %63 = arith.extui %62 : vector<8x128xi1> to vector<8x128xi32>
    %64 = arith.sitofp %63 : vector<8x128xi32> to vector<8x128xf32>
    %cst_7 = arith.constant 2.000000e+00 : f32
    %65 = vector.broadcast %cst_7 : f32 to vector<8x128xf32>
    %66 = arith.cmpf oeq, %56, %65 : vector<8x128xf32>
    %67 = arith.extui %66 : vector<8x128xi1> to vector<8x128xi32>
    %68 = arith.sitofp %67 : vector<8x128xi32> to vector<8x128xf32>
    %cst_8 = arith.constant 3.000000e+00 : f32
    %69 = vector.broadcast %cst_8 : f32 to vector<8x128xf32>
    %70 = arith.cmpf oeq, %56, %69 : vector<8x128xf32>
    %71 = arith.extui %70 : vector<8x128xi1> to vector<8x128xi32>
    %72 = arith.sitofp %71 : vector<8x128xi32> to vector<8x128xf32>
    %cst_9 = arith.constant 4.000000e+00 : f32
    %73 = vector.broadcast %cst_9 : f32 to vector<8x128xf32>
    %74 = arith.cmpf oeq, %56, %73 : vector<8x128xf32>
    %75 = arith.extui %74 : vector<8x128xi1> to vector<8x128xi32>
    %76 = arith.sitofp %75 : vector<8x128xi32> to vector<8x128xf32>
    %cst_10 = arith.constant 5.000000e+00 : f32
    %77 = vector.broadcast %cst_10 : f32 to vector<8x128xf32>
    %78 = arith.cmpf oeq, %56, %77 : vector<8x128xf32>
    %79 = arith.extui %78 : vector<8x128xi1> to vector<8x128xi32>
    %80 = arith.sitofp %79 : vector<8x128xi32> to vector<8x128xf32>
    %cst_11 = arith.constant 6.000000e+00 : f32
    %81 = vector.broadcast %cst_11 : f32 to vector<8x128xf32>
    %82 = arith.cmpf oeq, %56, %81 : vector<8x128xf32>
    %83 = arith.extui %82 : vector<8x128xi1> to vector<8x128xi32>
    %84 = arith.sitofp %83 : vector<8x128xi32> to vector<8x128xf32>
    %cst_12 = arith.constant 7.000000e+00 : f32
    %85 = vector.broadcast %cst_12 : f32 to vector<8x128xf32>
    %86 = arith.cmpf oeq, %56, %85 : vector<8x128xf32>
    %87 = arith.extui %86 : vector<8x128xi1> to vector<8x128xi32>
    %88 = arith.sitofp %87 : vector<8x128xi32> to vector<8x128xf32>
    %cst_13 = arith.constant 8.000000e+00 : f32
    %89 = vector.broadcast %cst_13 : f32 to vector<8x128xf32>
    %90 = arith.cmpf oeq, %56, %89 : vector<8x128xf32>
    %91 = arith.extui %90 : vector<8x128xi1> to vector<8x128xi32>
    %92 = arith.sitofp %91 : vector<8x128xi32> to vector<8x128xf32>
    %cst_14 = arith.constant 9.000000e+00 : f32
    %93 = vector.broadcast %cst_14 : f32 to vector<8x128xf32>
    %94 = arith.cmpf oeq, %56, %93 : vector<8x128xf32>
    %95 = arith.extui %94 : vector<8x128xi1> to vector<8x128xi32>
    %96 = arith.sitofp %95 : vector<8x128xi32> to vector<8x128xf32>
    %cst_15 = arith.constant 1.000000e+01 : f32
    %97 = vector.broadcast %cst_15 : f32 to vector<8x128xf32>
    %98 = arith.cmpf oeq, %56, %97 : vector<8x128xf32>
    %99 = arith.extui %98 : vector<8x128xi1> to vector<8x128xi32>
    %100 = arith.sitofp %99 : vector<8x128xi32> to vector<8x128xf32>
    %cst_16 = arith.constant 1.000000e+00 : f32
    %101 = vector.broadcast %cst_16 : f32 to vector<8x128xf32>
    %102 = arith.subf %55, %101 : vector<8x128xf32>
    %cst_17 = arith.constant 2.000000e+00 : f32
    %103 = vector.broadcast %cst_17 : f32 to vector<8x128xf32>
    %104 = arith.subf %55, %103 : vector<8x128xf32>
    %cst_18 = arith.constant 3.000000e+00 : f32
    %105 = vector.broadcast %cst_18 : f32 to vector<8x128xf32>
    %106 = arith.subf %55, %105 : vector<8x128xf32>
    %cst_19 = arith.constant 4.000000e+00 : f32
    %107 = vector.broadcast %cst_19 : f32 to vector<8x128xf32>
    %108 = arith.subf %55, %107 : vector<8x128xf32>
    %cst_20 = arith.constant 5.000000e+00 : f32
    %109 = vector.broadcast %cst_20 : f32 to vector<8x128xf32>
    %110 = arith.subf %55, %109 : vector<8x128xf32>
    %cst_21 = arith.constant 6.000000e+00 : f32
    %111 = vector.broadcast %cst_21 : f32 to vector<8x128xf32>
    %112 = arith.subf %55, %111 : vector<8x128xf32>
    %cst_22 = arith.constant 7.000000e+00 : f32
    %113 = vector.broadcast %cst_22 : f32 to vector<8x128xf32>
    %114 = arith.subf %55, %113 : vector<8x128xf32>
    %cst_23 = arith.constant 8.000000e+00 : f32
    %115 = vector.broadcast %cst_23 : f32 to vector<8x128xf32>
    %116 = arith.subf %55, %115 : vector<8x128xf32>
    %cst_24 = arith.constant 9.000000e+00 : f32
    %117 = vector.broadcast %cst_24 : f32 to vector<8x128xf32>
    %118 = arith.subf %55, %117 : vector<8x128xf32>
    %cst_25 = arith.constant 1.000000e+01 : f32
    %119 = vector.broadcast %cst_25 : f32 to vector<8x128xf32>
    %120 = arith.subf %55, %119 : vector<8x128xf32>
    %cst_26 = arith.constant 1.000000e+00 : f32
    %121 = vector.broadcast %cst_26 : f32 to vector<8x128xf32>
    %122 = arith.subf %121, %102 : vector<8x128xf32>
    %cst_27 = arith.constant 1.000000e+00 : f32
    %123 = vector.broadcast %cst_27 : f32 to vector<8x128xf32>
    %124 = arith.subf %123, %104 : vector<8x128xf32>
    %cst_28 = arith.constant 1.000000e+00 : f32
    %125 = vector.broadcast %cst_28 : f32 to vector<8x128xf32>
    %126 = arith.subf %125, %106 : vector<8x128xf32>
    %cst_29 = arith.constant 1.000000e+00 : f32
    %127 = vector.broadcast %cst_29 : f32 to vector<8x128xf32>
    %128 = arith.subf %127, %108 : vector<8x128xf32>
    %cst_30 = arith.constant 1.000000e+00 : f32
    %129 = vector.broadcast %cst_30 : f32 to vector<8x128xf32>
    %130 = arith.subf %129, %110 : vector<8x128xf32>
    %cst_31 = arith.constant 1.000000e+00 : f32
    %131 = vector.broadcast %cst_31 : f32 to vector<8x128xf32>
    %132 = arith.subf %131, %112 : vector<8x128xf32>
    %cst_32 = arith.constant 1.000000e+00 : f32
    %133 = vector.broadcast %cst_32 : f32 to vector<8x128xf32>
    %134 = arith.subf %133, %114 : vector<8x128xf32>
    %cst_33 = arith.constant 1.000000e+00 : f32
    %135 = vector.broadcast %cst_33 : f32 to vector<8x128xf32>
    %136 = arith.subf %135, %116 : vector<8x128xf32>
    %cst_34 = arith.constant 1.000000e+00 : f32
    %137 = vector.broadcast %cst_34 : f32 to vector<8x128xf32>
    %138 = arith.subf %137, %118 : vector<8x128xf32>
    %cst_35 = arith.constant 1.000000e+00 : f32
    %139 = vector.broadcast %cst_35 : f32 to vector<8x128xf32>
    %140 = arith.subf %139, %120 : vector<8x128xf32>
    %141 = arith.mulf %55, %60 : vector<8x128xf32>
    %142 = arith.mulf %122, %64 : vector<8x128xf32>
    %143 = arith.addf %141, %142 : vector<8x128xf32>
    %144 = arith.mulf %102, %64 : vector<8x128xf32>
    %145 = arith.mulf %124, %68 : vector<8x128xf32>
    %146 = arith.addf %144, %145 : vector<8x128xf32>
    %147 = arith.mulf %104, %68 : vector<8x128xf32>
    %148 = arith.mulf %126, %72 : vector<8x128xf32>
    %149 = arith.addf %147, %148 : vector<8x128xf32>
    %150 = arith.mulf %106, %72 : vector<8x128xf32>
    %151 = arith.mulf %128, %76 : vector<8x128xf32>
    %152 = arith.addf %150, %151 : vector<8x128xf32>
    %153 = arith.mulf %108, %76 : vector<8x128xf32>
    %154 = arith.mulf %130, %80 : vector<8x128xf32>
    %155 = arith.addf %153, %154 : vector<8x128xf32>
    %156 = arith.mulf %110, %80 : vector<8x128xf32>
    %157 = arith.mulf %132, %84 : vector<8x128xf32>
    %158 = arith.addf %156, %157 : vector<8x128xf32>
    %159 = arith.mulf %112, %84 : vector<8x128xf32>
    %160 = arith.mulf %134, %88 : vector<8x128xf32>
    %161 = arith.addf %159, %160 : vector<8x128xf32>
    %162 = arith.mulf %114, %88 : vector<8x128xf32>
    %163 = arith.mulf %136, %92 : vector<8x128xf32>
    %164 = arith.addf %162, %163 : vector<8x128xf32>
    %165 = arith.mulf %116, %92 : vector<8x128xf32>
    %166 = arith.mulf %138, %96 : vector<8x128xf32>
    %167 = arith.addf %165, %166 : vector<8x128xf32>
    %168 = arith.mulf %118, %96 : vector<8x128xf32>
    %169 = arith.mulf %140, %100 : vector<8x128xf32>
    %170 = arith.addf %168, %169 : vector<8x128xf32>
    %cst_36 = arith.constant 5.000000e-01 : f32
    %171 = vector.broadcast %cst_36 : f32 to vector<8x128xf32>
    %172 = arith.mulf %55, %171 : vector<8x128xf32>
    %cst_37 = arith.constant 5.000000e-01 : f32
    %173 = vector.broadcast %cst_37 : f32 to vector<8x128xf32>
    %174 = arith.subf %172, %173 : vector<8x128xf32>
    %cst_38 = arith.constant 1.000000e+00 : f32
    %175 = vector.broadcast %cst_38 : f32 to vector<8x128xf32>
    %176 = arith.subf %172, %175 : vector<8x128xf32>
    %cst_39 = arith.constant 1.500000e+00 : f32
    %177 = vector.broadcast %cst_39 : f32 to vector<8x128xf32>
    %178 = arith.subf %172, %177 : vector<8x128xf32>
    %cst_40 = arith.constant 2.000000e+00 : f32
    %179 = vector.broadcast %cst_40 : f32 to vector<8x128xf32>
    %180 = arith.subf %172, %179 : vector<8x128xf32>
    %cst_41 = arith.constant 2.500000e+00 : f32
    %181 = vector.broadcast %cst_41 : f32 to vector<8x128xf32>
    %182 = arith.subf %172, %181 : vector<8x128xf32>
    %cst_42 = arith.constant 3.000000e+00 : f32
    %183 = vector.broadcast %cst_42 : f32 to vector<8x128xf32>
    %184 = arith.subf %172, %183 : vector<8x128xf32>
    %cst_43 = arith.constant 3.500000e+00 : f32
    %185 = vector.broadcast %cst_43 : f32 to vector<8x128xf32>
    %186 = arith.subf %172, %185 : vector<8x128xf32>
    %cst_44 = arith.constant 4.000000e+00 : f32
    %187 = vector.broadcast %cst_44 : f32 to vector<8x128xf32>
    %188 = arith.subf %172, %187 : vector<8x128xf32>
    %cst_45 = arith.constant 4.500000e+00 : f32
    %189 = vector.broadcast %cst_45 : f32 to vector<8x128xf32>
    %190 = arith.subf %172, %189 : vector<8x128xf32>
    %cst_46 = arith.constant 1.000000e+00 : f32
    %191 = vector.broadcast %cst_46 : f32 to vector<8x128xf32>
    %192 = arith.subf %191, %174 : vector<8x128xf32>
    %cst_47 = arith.constant 1.000000e+00 : f32
    %193 = vector.broadcast %cst_47 : f32 to vector<8x128xf32>
    %194 = arith.subf %193, %176 : vector<8x128xf32>
    %cst_48 = arith.constant 1.000000e+00 : f32
    %195 = vector.broadcast %cst_48 : f32 to vector<8x128xf32>
    %196 = arith.subf %195, %178 : vector<8x128xf32>
    %cst_49 = arith.constant 1.000000e+00 : f32
    %197 = vector.broadcast %cst_49 : f32 to vector<8x128xf32>
    %198 = arith.subf %197, %180 : vector<8x128xf32>
    %cst_50 = arith.constant 1.000000e+00 : f32
    %199 = vector.broadcast %cst_50 : f32 to vector<8x128xf32>
    %200 = arith.subf %199, %182 : vector<8x128xf32>
    %cst_51 = arith.constant 1.000000e+00 : f32
    %201 = vector.broadcast %cst_51 : f32 to vector<8x128xf32>
    %202 = arith.subf %201, %184 : vector<8x128xf32>
    %cst_52 = arith.constant 1.000000e+00 : f32
    %203 = vector.broadcast %cst_52 : f32 to vector<8x128xf32>
    %204 = arith.subf %203, %186 : vector<8x128xf32>
    %cst_53 = arith.constant 1.000000e+00 : f32
    %205 = vector.broadcast %cst_53 : f32 to vector<8x128xf32>
    %206 = arith.subf %205, %188 : vector<8x128xf32>
    %cst_54 = arith.constant 1.000000e+00 : f32
    %207 = vector.broadcast %cst_54 : f32 to vector<8x128xf32>
    %208 = arith.subf %207, %190 : vector<8x128xf32>
    %209 = arith.mulf %172, %143 : vector<8x128xf32>
    %210 = arith.mulf %192, %146 : vector<8x128xf32>
    %211 = arith.addf %209, %210 : vector<8x128xf32>
    %212 = arith.mulf %174, %146 : vector<8x128xf32>
    %213 = arith.mulf %194, %149 : vector<8x128xf32>
    %214 = arith.addf %212, %213 : vector<8x128xf32>
    %215 = arith.mulf %176, %149 : vector<8x128xf32>
    %216 = arith.mulf %196, %152 : vector<8x128xf32>
    %217 = arith.addf %215, %216 : vector<8x128xf32>
    %218 = arith.mulf %178, %152 : vector<8x128xf32>
    %219 = arith.mulf %198, %155 : vector<8x128xf32>
    %220 = arith.addf %218, %219 : vector<8x128xf32>
    %221 = arith.mulf %180, %155 : vector<8x128xf32>
    %222 = arith.mulf %200, %158 : vector<8x128xf32>
    %223 = arith.addf %221, %222 : vector<8x128xf32>
    %224 = arith.mulf %182, %158 : vector<8x128xf32>
    %225 = arith.mulf %202, %161 : vector<8x128xf32>
    %226 = arith.addf %224, %225 : vector<8x128xf32>
    %227 = arith.mulf %184, %161 : vector<8x128xf32>
    %228 = arith.mulf %204, %164 : vector<8x128xf32>
    %229 = arith.addf %227, %228 : vector<8x128xf32>
    %230 = arith.mulf %186, %164 : vector<8x128xf32>
    %231 = arith.mulf %206, %167 : vector<8x128xf32>
    %232 = arith.addf %230, %231 : vector<8x128xf32>
    %233 = arith.mulf %188, %167 : vector<8x128xf32>
    %234 = arith.mulf %208, %170 : vector<8x128xf32>
    %235 = arith.addf %233, %234 : vector<8x128xf32>
    %cst_55 = arith.constant 0.333333343 : f32
    %236 = vector.broadcast %cst_55 : f32 to vector<8x128xf32>
    %237 = arith.mulf %55, %236 : vector<8x128xf32>
    %cst_56 = arith.constant 0.333333343 : f32
    %238 = vector.broadcast %cst_56 : f32 to vector<8x128xf32>
    %239 = arith.subf %237, %238 : vector<8x128xf32>
    %cst_57 = arith.constant 0.666666686 : f32
    %240 = vector.broadcast %cst_57 : f32 to vector<8x128xf32>
    %241 = arith.subf %237, %240 : vector<8x128xf32>
    %cst_58 = arith.constant 1.000000e+00 : f32
    %242 = vector.broadcast %cst_58 : f32 to vector<8x128xf32>
    %243 = arith.subf %237, %242 : vector<8x128xf32>
    %cst_59 = arith.constant 1.33333337 : f32
    %244 = vector.broadcast %cst_59 : f32 to vector<8x128xf32>
    %245 = arith.subf %237, %244 : vector<8x128xf32>
    %cst_60 = arith.constant 1.66666663 : f32
    %246 = vector.broadcast %cst_60 : f32 to vector<8x128xf32>
    %247 = arith.subf %237, %246 : vector<8x128xf32>
    %cst_61 = arith.constant 2.000000e+00 : f32
    %248 = vector.broadcast %cst_61 : f32 to vector<8x128xf32>
    %249 = arith.subf %237, %248 : vector<8x128xf32>
    %cst_62 = arith.constant 2.33333325 : f32
    %250 = vector.broadcast %cst_62 : f32 to vector<8x128xf32>
    %251 = arith.subf %237, %250 : vector<8x128xf32>
    %cst_63 = arith.constant 2.66666675 : f32
    %252 = vector.broadcast %cst_63 : f32 to vector<8x128xf32>
    %253 = arith.subf %237, %252 : vector<8x128xf32>
    %cst_64 = arith.constant 1.000000e+00 : f32
    %254 = vector.broadcast %cst_64 : f32 to vector<8x128xf32>
    %255 = arith.subf %254, %239 : vector<8x128xf32>
    %cst_65 = arith.constant 1.000000e+00 : f32
    %256 = vector.broadcast %cst_65 : f32 to vector<8x128xf32>
    %257 = arith.subf %256, %241 : vector<8x128xf32>
    %cst_66 = arith.constant 1.000000e+00 : f32
    %258 = vector.broadcast %cst_66 : f32 to vector<8x128xf32>
    %259 = arith.subf %258, %243 : vector<8x128xf32>
    %cst_67 = arith.constant 1.000000e+00 : f32
    %260 = vector.broadcast %cst_67 : f32 to vector<8x128xf32>
    %261 = arith.subf %260, %245 : vector<8x128xf32>
    %cst_68 = arith.constant 1.000000e+00 : f32
    %262 = vector.broadcast %cst_68 : f32 to vector<8x128xf32>
    %263 = arith.subf %262, %247 : vector<8x128xf32>
    %cst_69 = arith.constant 1.000000e+00 : f32
    %264 = vector.broadcast %cst_69 : f32 to vector<8x128xf32>
    %265 = arith.subf %264, %249 : vector<8x128xf32>
    %cst_70 = arith.constant 1.000000e+00 : f32
    %266 = vector.broadcast %cst_70 : f32 to vector<8x128xf32>
    %267 = arith.subf %266, %251 : vector<8x128xf32>
    %cst_71 = arith.constant 1.000000e+00 : f32
    %268 = vector.broadcast %cst_71 : f32 to vector<8x128xf32>
    %269 = arith.subf %268, %253 : vector<8x128xf32>
    %270 = arith.mulf %237, %211 : vector<8x128xf32>
    %271 = arith.mulf %255, %214 : vector<8x128xf32>
    %272 = arith.addf %270, %271 : vector<8x128xf32>
    %273 = arith.mulf %239, %214 : vector<8x128xf32>
    %274 = arith.mulf %257, %217 : vector<8x128xf32>
    %275 = arith.addf %273, %274 : vector<8x128xf32>
    %276 = arith.mulf %241, %217 : vector<8x128xf32>
    %277 = arith.mulf %259, %220 : vector<8x128xf32>
    %278 = arith.addf %276, %277 : vector<8x128xf32>
    %279 = arith.mulf %243, %220 : vector<8x128xf32>
    %280 = arith.mulf %261, %223 : vector<8x128xf32>
    %281 = arith.addf %279, %280 : vector<8x128xf32>
    %282 = arith.mulf %245, %223 : vector<8x128xf32>
    %283 = arith.mulf %263, %226 : vector<8x128xf32>
    %284 = arith.addf %282, %283 : vector<8x128xf32>
    %285 = arith.mulf %247, %226 : vector<8x128xf32>
    %286 = arith.mulf %265, %229 : vector<8x128xf32>
    %287 = arith.addf %285, %286 : vector<8x128xf32>
    %288 = arith.mulf %249, %229 : vector<8x128xf32>
    %289 = arith.mulf %267, %232 : vector<8x128xf32>
    %290 = arith.addf %288, %289 : vector<8x128xf32>
    %291 = arith.mulf %251, %232 : vector<8x128xf32>
    %292 = arith.mulf %269, %235 : vector<8x128xf32>
    %293 = arith.addf %291, %292 : vector<8x128xf32>
    %294 = vector.broadcast %4 : f32 to vector<8x128xf32>
    %295 = arith.mulf %294, %272 : vector<8x128xf32>
    %296 = arith.addf %45, %295 : vector<8x128xf32>
    %297 = vector.broadcast %5 : f32 to vector<8x128xf32>
    %298 = arith.mulf %297, %275 : vector<8x128xf32>
    %299 = arith.addf %296, %298 : vector<8x128xf32>
    %300 = vector.broadcast %6 : f32 to vector<8x128xf32>
    %301 = arith.mulf %300, %278 : vector<8x128xf32>
    %302 = arith.addf %299, %301 : vector<8x128xf32>
    %303 = vector.broadcast %7 : f32 to vector<8x128xf32>
    %304 = arith.mulf %303, %281 : vector<8x128xf32>
    %305 = arith.addf %302, %304 : vector<8x128xf32>
    %306 = vector.broadcast %8 : f32 to vector<8x128xf32>
    %307 = arith.mulf %306, %284 : vector<8x128xf32>
    %308 = arith.addf %305, %307 : vector<8x128xf32>
    %309 = vector.broadcast %9 : f32 to vector<8x128xf32>
    %310 = arith.mulf %309, %287 : vector<8x128xf32>
    %311 = arith.addf %308, %310 : vector<8x128xf32>
    %312 = vector.broadcast %10 : f32 to vector<8x128xf32>
    %313 = arith.mulf %312, %290 : vector<8x128xf32>
    %314 = arith.addf %311, %313 : vector<8x128xf32>
    %315 = vector.broadcast %11 : f32 to vector<8x128xf32>
    %316 = arith.mulf %315, %293 : vector<8x128xf32>
    %317 = arith.addf %314, %316 : vector<8x128xf32>
    %318 = vector.broadcast %12 : f32 to vector<8x128xf32>
    %319 = arith.mulf %318, %272 : vector<8x128xf32>
    %320 = arith.addf %47, %319 : vector<8x128xf32>
    %321 = vector.broadcast %13 : f32 to vector<8x128xf32>
    %322 = arith.mulf %321, %275 : vector<8x128xf32>
    %323 = arith.addf %320, %322 : vector<8x128xf32>
    %324 = vector.broadcast %14 : f32 to vector<8x128xf32>
    %325 = arith.mulf %324, %278 : vector<8x128xf32>
    %326 = arith.addf %323, %325 : vector<8x128xf32>
    %327 = vector.broadcast %15 : f32 to vector<8x128xf32>
    %328 = arith.mulf %327, %281 : vector<8x128xf32>
    %329 = arith.addf %326, %328 : vector<8x128xf32>
    %330 = vector.broadcast %16 : f32 to vector<8x128xf32>
    %331 = arith.mulf %330, %284 : vector<8x128xf32>
    %332 = arith.addf %329, %331 : vector<8x128xf32>
    %333 = vector.broadcast %17 : f32 to vector<8x128xf32>
    %334 = arith.mulf %333, %287 : vector<8x128xf32>
    %335 = arith.addf %332, %334 : vector<8x128xf32>
    %336 = vector.broadcast %18 : f32 to vector<8x128xf32>
    %337 = arith.mulf %336, %290 : vector<8x128xf32>
    %338 = arith.addf %335, %337 : vector<8x128xf32>
    %339 = vector.broadcast %19 : f32 to vector<8x128xf32>
    %340 = arith.mulf %339, %293 : vector<8x128xf32>
    %341 = arith.addf %338, %340 : vector<8x128xf32>
    %342 = vector.broadcast %20 : f32 to vector<8x128xf32>
    %343 = arith.mulf %342, %272 : vector<8x128xf32>
    %344 = arith.addf %49, %343 : vector<8x128xf32>
    %345 = vector.broadcast %21 : f32 to vector<8x128xf32>
    %346 = arith.mulf %345, %275 : vector<8x128xf32>
    %347 = arith.addf %344, %346 : vector<8x128xf32>
    %348 = vector.broadcast %22 : f32 to vector<8x128xf32>
    %349 = arith.mulf %348, %278 : vector<8x128xf32>
    %350 = arith.addf %347, %349 : vector<8x128xf32>
    %351 = vector.broadcast %23 : f32 to vector<8x128xf32>
    %352 = arith.mulf %351, %281 : vector<8x128xf32>
    %353 = arith.addf %350, %352 : vector<8x128xf32>
    %354 = vector.broadcast %24 : f32 to vector<8x128xf32>
    %355 = arith.mulf %354, %284 : vector<8x128xf32>
    %356 = arith.addf %353, %355 : vector<8x128xf32>
    %357 = vector.broadcast %25 : f32 to vector<8x128xf32>
    %358 = arith.mulf %357, %287 : vector<8x128xf32>
    %359 = arith.addf %356, %358 : vector<8x128xf32>
    %360 = vector.broadcast %26 : f32 to vector<8x128xf32>
    %361 = arith.mulf %360, %290 : vector<8x128xf32>
    %362 = arith.addf %359, %361 : vector<8x128xf32>
    %363 = vector.broadcast %27 : f32 to vector<8x128xf32>
    %364 = arith.mulf %363, %293 : vector<8x128xf32>
    %365 = arith.addf %362, %364 : vector<8x128xf32>
    %366 = vector.broadcast %28 : f32 to vector<8x128xf32>
    %367 = arith.mulf %366, %272 : vector<8x128xf32>
    %368 = arith.addf %51, %367 : vector<8x128xf32>
    %369 = vector.broadcast %29 : f32 to vector<8x128xf32>
    %370 = arith.mulf %369, %275 : vector<8x128xf32>
    %371 = arith.addf %368, %370 : vector<8x128xf32>
    %372 = vector.broadcast %30 : f32 to vector<8x128xf32>
    %373 = arith.mulf %372, %278 : vector<8x128xf32>
    %374 = arith.addf %371, %373 : vector<8x128xf32>
    %375 = vector.broadcast %31 : f32 to vector<8x128xf32>
    %376 = arith.mulf %375, %281 : vector<8x128xf32>
    %377 = arith.addf %374, %376 : vector<8x128xf32>
    %378 = vector.broadcast %32 : f32 to vector<8x128xf32>
    %379 = arith.mulf %378, %284 : vector<8x128xf32>
    %380 = arith.addf %377, %379 : vector<8x128xf32>
    %381 = vector.broadcast %33 : f32 to vector<8x128xf32>
    %382 = arith.mulf %381, %287 : vector<8x128xf32>
    %383 = arith.addf %380, %382 : vector<8x128xf32>
    %384 = vector.broadcast %34 : f32 to vector<8x128xf32>
    %385 = arith.mulf %384, %290 : vector<8x128xf32>
    %386 = arith.addf %383, %385 : vector<8x128xf32>
    %387 = vector.broadcast %35 : f32 to vector<8x128xf32>
    %388 = arith.mulf %387, %293 : vector<8x128xf32>
    %389 = arith.addf %386, %388 : vector<8x128xf32>
    %c0_72 = arith.constant 0 : index
    %c0_73 = arith.constant 0 : index
    %c0_74 = arith.constant 0 : index
    %390 = vector.load %arg3[%c0_72, %c0_73, %c0_74] : memref<4x8x128xf32, #tpu.memory_space<vmem>>, vector<1x8x128xf32>
    %391 = vector.shape_cast %390 : vector<1x8x128xf32> to vector<8x128xf32>
    %392 = vector.shape_cast %317 : vector<8x128xf32> to vector<1x8x128xf32>
    tpu.vector_store %arg3[%c0_72, %c0_73, %c0_74], %392 {strides = array<i32>} : memref<4x8x128xf32, #tpu.memory_space<vmem>>, vector<1x8x128xf32>,
    %c1_75 = arith.constant 1 : index
    %c0_76 = arith.constant 0 : index
    %c0_77 = arith.constant 0 : index
    %393 = vector.load %arg3[%c1_75, %c0_76, %c0_77] : memref<4x8x128xf32, #tpu.memory_space<vmem>>, vector<1x8x128xf32>
    %394 = vector.shape_cast %393 : vector<1x8x128xf32> to vector<8x128xf32>
    %395 = vector.shape_cast %341 : vector<8x128xf32> to vector<1x8x128xf32>
    tpu.vector_store %arg3[%c1_75, %c0_76, %c0_77], %395 {strides = array<i32>} : memref<4x8x128xf32, #tpu.memory_space<vmem>>, vector<1x8x128xf32>,
    %c2_78 = arith.constant 2 : index
    %c0_79 = arith.constant 0 : index
    %c0_80 = arith.constant 0 : index
    %396 = vector.load %arg3[%c2_78, %c0_79, %c0_80] : memref<4x8x128xf32, #tpu.memory_space<vmem>>, vector<1x8x128xf32>
    %397 = vector.shape_cast %396 : vector<1x8x128xf32> to vector<8x128xf32>
    %398 = vector.shape_cast %365 : vector<8x128xf32> to vector<1x8x128xf32>
    tpu.vector_store %arg3[%c2_78, %c0_79, %c0_80], %398 {strides = array<i32>} : memref<4x8x128xf32, #tpu.memory_space<vmem>>, vector<1x8x128xf32>,
    %c3_81 = arith.constant 3 : index
    %c0_82 = arith.constant 0 : index
    %c0_83 = arith.constant 0 : index
    %399 = vector.load %arg3[%c3_81, %c0_82, %c0_83] : memref<4x8x128xf32, #tpu.memory_space<vmem>>, vector<1x8x128xf32>
    %400 = vector.shape_cast %399 : vector<1x8x128xf32> to vector<8x128xf32>
    %401 = vector.shape_cast %389 : vector<8x128xf32> to vector<1x8x128xf32>
    tpu.vector_store %arg3[%c3_81, %c0_82, %c0_83], %401 {strides = array<i32>} : memref<4x8x128xf32, #tpu.memory_space<vmem>>, vector<1x8x128xf32>,
    return
  }
  func.func @transform_0(%arg0: i32) -> i32 {
    %c0_i32 = arith.constant 0 : i32
    %c0_i32_0 = arith.constant 0 : i32
    return %c0_i32 : i32
  }
  func.func @transform_1(%arg0: i32) -> (i32, i32, i32) {
    %c0_i32 = arith.constant 0 : i32
    %c0_i32_0 = arith.constant 0 : i32
    %c0_i32_1 = arith.constant 0 : i32
    return %c0_i32, %arg0, %c0_i32_0 : i32, i32, i32
  }
  func.func @transform_2(%arg0: i32) -> (i32, i32, i32) {
    %c0_i32 = arith.constant 0 : i32
    %c0_i32_0 = arith.constant 0 : i32
    %c0_i32_1 = arith.constant 0 : i32
    return %c0_i32, %arg0, %c0_i32_0 : i32, i32, i32
  }
}

</mosaic_0001>

<llo_original>
// kernel: tpu_custom_call.1
$region0: #{tpu_custom_call.1}
  #allocation0 [shape = 'u32[]', space=smem, size = 0x4, offset = 0x4, fixed_abs, tag = 'smem constant byte address 0x4 - core index']
  #allocation1 [shape = 'u32[144,128]{1,0:T(1,128)}', space=vmem, size = 0x12000, scoped, tag = 'internal scratch']
  %s0 = inlined_call_operand.hbm [shape: f32[36], index: 0, kind: input, shape index: {}]
  %s1 = inlined_call_operand.hbm [shape: f32[1,8,128], index: 1, kind: input, shape index: {}]
  %s2 = inlined_call_operand.hbm [shape: f32[4,8,128], index: 2, kind: output, shape index: {}]
  %s3 = sld [smem:[#allocation0]]
  $region26: #{tpu_custom_call.1} parent=0
    _
  %s5 = ssub.s32 1, %s3
  %s6 = scalar_select 0, %s5, %s3
  $region1: #{tpu_custom_call.1} parent=0
    #allocation2 [shape = 'u8[512]{0}', space=smem, size = 0x200, scoped, tag = 'input window, operand 0, single buffered']
    #allocation3 [shape = 's32[1]{0}', space=sflag, size = 0x4, scoped, tag = 'scoped memory for tpu_custom_call.1']
    #allocation4 [shape = 's32[1]{0}', space=sflag, size = 0x4, scoped, tag = 'scoped memory for tpu_custom_call.1']
    #allocation5 [shape = 's32[1]{0}', space=sflag, size = 0x4, scoped, tag = 'scoped memory for tpu_custom_call.1']
    #allocation6 [shape = 'u8[4096]{0}', space=vmem, size = 0x1000, scoped, tag = 'input window, operand 1, single buffered']
    #allocation7 [shape = 'u8[16384]{0}', space=vmem, size = 0x4000, scoped, tag = 'output window, operand 0, single buffered']
    %7 = vsyncpa [#allocation5], 0
    %8 = vsyncpa [#allocation3], 0
    %9 = vsyncpa [#allocation4], 0
    // Predicated region
    $region2: #{tpu_custom_call.1} parent=1 // pred_check
      _
    $region3: #{tpu_custom_call.1} parent=1 // pred_check_branch
      %11 = sbr.rel (0) target = $region5
    $region4: #{tpu_custom_call.1} parent=1 // pred_region
      %s13 = ssub.s32 16, 16
      %14 = vsyncadd [#allocation5], %s13
      %17 = dma.hbm_to_smem %s0, 16, [#allocation2], [#allocation5]
    $region5: #{tpu_custom_call.1} parent=1 // pred_fallthru
      _
    // Predicated region
    $region6: #{tpu_custom_call.1} parent=1 // pred_check
      _
    $region7: #{tpu_custom_call.1} parent=1 // pred_check_branch
      %19 = sbr.rel (0) target = $region9
    $region8: #{tpu_custom_call.1} parent=1 // pred_region
      %s21 = ssub.s32 128, 128
      %22 = vsyncadd [#allocation3], %s21
      %s24 = sshll.u32 [#allocation6], 4
      %s25 = int_to_ptr.vmem [resolvable:$true] %s24
      %27 = dma.hbm_to_vmem [thread:$0]  %s1, 128, %s25, [#allocation3]
    $region9: #{tpu_custom_call.1} parent=1 // pred_fallthru
      _
    // Predicated region
    $region10: #{tpu_custom_call.1} parent=1 // pred_check
      _
    $region11: #{tpu_custom_call.1} parent=1 // pred_check_branch
      %29 = sbr.rel (0) target = $region13
    $region12: #{tpu_custom_call.1} parent=1 // pred_region
      %30 = dma.done [#allocation5], 16
    $region13: #{tpu_custom_call.1} parent=1 // pred_fallthru
      _
    // Predicated region
    $region14: #{tpu_custom_call.1} parent=1 // pred_check
      _
    $region15: #{tpu_custom_call.1} parent=1 // pred_check_branch
      %32 = sbr.rel (0) target = $region17
    $region16: #{tpu_custom_call.1} parent=1 // pred_region
      %33 = dma.done [#allocation3], 128
    $region17: #{tpu_custom_call.1} parent=1 // pred_fallthru
      _
    %34 = sfence
    %s35 = sld [smem:[#allocation2]]
    %s36 = sld [smem:[#allocation2 + $0x1]]
    %s37 = sld [smem:[#allocation2 + $0x2]]
    %s38 = sld [smem:[#allocation2 + $0x3]]
    %s39 = sld [smem:[#allocation2 + $0x4]]
    %s40 = sld [smem:[#allocation2 + $0x5]]
    %s41 = sld [smem:[#allocation2 + $0x6]]
    %s42 = sld [smem:[#allocation2 + $0x7]]
    %s43 = sld [smem:[#allocation2 + $0x8]]
    %s44 = sld [smem:[#allocation2 + $0x9]]
    %s45 = sld [smem:[#allocation2 + $0xa]]
    %s46 = sld [smem:[#allocation2 + $0xb]]
    %s47 = sld [smem:[#allocation2 + $0xc]]
    %s48 = sld [smem:[#allocation2 + $0xd]]
    %s49 = sld [smem:[#allocation2 + $0xe]]
    %s50 = sld [smem:[#allocation2 + $0xf]]
    %s51 = sld [smem:[#allocation2 + $0x10]]
    %s52 = sld [smem:[#allocation2 + $0x11]]
    %s53 = sld [smem:[#allocation2 + $0x12]]
    %s54 = sld [smem:[#allocation2 + $0x13]]
    %s55 = sld [smem:[#allocation2 + $0x14]]
    %s56 = sld [smem:[#allocation2 + $0x15]]
    %s57 = sld [smem:[#allocation2 + $0x16]]
    %s58 = sld [smem:[#allocation2 + $0x17]]
    %s59 = sld [smem:[#allocation2 + $0x18]]
    %s60 = sld [smem:[#allocation2 + $0x19]]
    %s61 = sld [smem:[#allocation2 + $0x1a]]
    %s62 = sld [smem:[#allocation2 + $0x1b]]
    %s63 = sld [smem:[#allocation2 + $0x1c]]
    %s64 = sld [smem:[#allocation2 + $0x1d]]
    %s65 = sld [smem:[#allocation2 + $0x1e]]
    %s66 = sld [smem:[#allocation2 + $0x1f]]
    %s67 = sld [smem:[#allocation2 + $0x20]]
    %s68 = sld [smem:[#allocation2 + $0x21]]
    %s69 = sld [smem:[#allocation2 + $0x22]]
    %s70 = sld [smem:[#allocation2 + $0x23]]
    %v71 = vld [vmem:[#allocation6] sm:$0xff]
    %v72 = vxor.u32 %v71, 2147483648
    %v73 = vmul.f32 %v72, 1.442695
    %v74 = vpow.pop %v73
    %v75 = vadd.f32 %v74, 1.0
    %v76 = vrcp.pop %v75
    %v77 = vmul.f32 1.0, %v76
    %v78 = vmul.f32 %v71, %v77
    %v79 = vstv %s35
    %v80 = vmul.f32 %v79, %v78
    %v81 = vstv %s36
    %v82 = vmul.f32 %v81, %v78
    %v83 = vstv %s37
    %v84 = vmul.f32 %v83, %v78
    %v85 = vstv %s38
    %v86 = vmul.f32 %v85, %v78
    %v87 = vsub.f32 %v71, -2.2
    %v88 = vmul.f32 %v87, 2.5
    %v89 = vfloor.f32 %v88
    %vm90 = vcmp.eq.f32.partialorder %v89, 0.0
    %v91 = vsel %vm90, 1, 0
    %v92 = vcvt.s32.f32 %v91
    %vm93 = vcmp.eq.f32.partialorder %v89, 1.0
    %v94 = vsel %vm93, 1, 0
    %v95 = vcvt.s32.f32 %v94
    %vm96 = vcmp.eq.f32.partialorder %v89, 2.0
    %v97 = vsel %vm96, 1, 0
    %v98 = vcvt.s32.f32 %v97
    %vm99 = vcmp.eq.f32.partialorder %v89, 3.0
    %v100 = vsel %vm99, 1, 0
    %v101 = vcvt.s32.f32 %v100
    %vm102 = vcmp.eq.f32.partialorder %v89, 4.0
    %v103 = vsel %vm102, 1, 0
    %v104 = vcvt.s32.f32 %v103
    %vm105 = vcmp.eq.f32.partialorder %v89, 5.0
    %v106 = vsel %vm105, 1, 0
    %v107 = vcvt.s32.f32 %v106
    %vm108 = vcmp.eq.f32.partialorder %v89, 6.0
    %v109 = vsel %vm108, 1, 0
    %v110 = vcvt.s32.f32 %v109
    %vm111 = vcmp.eq.f32.partialorder %v89, 7.0
    %v112 = vsel %vm111, 1, 0
    %v113 = vcvt.s32.f32 %v112
    %vm114 = vcmp.eq.f32.partialorder %v89, 8.0
    %v115 = vsel %vm114, 1, 0
    %v116 = vcvt.s32.f32 %v115
    %vm117 = vcmp.eq.f32.partialorder %v89, 9.0
    %v118 = vsel %vm117, 1, 0
    %v119 = vcvt.s32.f32 %v118
    %vm120 = vcmp.eq.f32.partialorder %v89, 10.0
    %v121 = vsel %vm120, 1, 0
    %v122 = vcvt.s32.f32 %v121
    %v123 = vsub.f32 %v88, 1.0
    %v124 = vsub.f32 %v88, 2.0
    %v125 = vsub.f32 %v88, 3.0
    %v126 = vsub.f32 %v88, 4.0
    %v127 = vsub.f32 %v88, 5.0
    %v128 = vsub.f32 %v88, 6.0
    %v129 = vsub.f32 %v88, 7.0
    %v130 = vsub.f32 %v88, 8.0
    %v131 = vsub.f32 %v88, 9.0
    %v132 = vsub.f32 %v88, 10.0
    %v133 = vsub.f32 1.0, %v123
    %v134 = vsub.f32 1.0, %v124
    %v135 = vsub.f32 1.0, %v125
    %v136 = vsub.f32 1.0, %v126
    %v137 = vsub.f32 1.0, %v127
    %v138 = vsub.f32 1.0, %v128
    %v139 = vsub.f32 1.0, %v129
    %v140 = vsub.f32 1.0, %v130
    %v141 = vsub.f32 1.0, %v131
    %v142 = vsub.f32 1.0, %v132
    %v143 = vmul.f32 %v88, %v92
    %v144 = vmul.f32 %v133, %v95
    %v145 = vadd.f32 %v143, %v144
    %v146 = vmul.f32 %v123, %v95
    %v147 = vmul.f32 %v134, %v98
    %v148 = vadd.f32 %v146, %v147
    %v149 = vmul.f32 %v124, %v98
    %v150 = vmul.f32 %v135, %v101
    %v151 = vadd.f32 %v149, %v150
    %v152 = vmul.f32 %v125, %v101
    %v153 = vmul.f32 %v136, %v104
    %v154 = vadd.f32 %v152, %v153
    %v155 = vmul.f32 %v126, %v104
    %v156 = vmul.f32 %v137, %v107
    %v157 = vadd.f32 %v155, %v156
    %v158 = vmul.f32 %v127, %v107
    %v159 = vmul.f32 %v138, %v110
    %v160 = vadd.f32 %v158, %v159
    %v161 = vmul.f32 %v128, %v110
    %v162 = vmul.f32 %v139, %v113
    %v163 = vadd.f32 %v161, %v162
    %v164 = vmul.f32 %v129, %v113
    %v165 = vmul.f32 %v140, %v116
    %v166 = vadd.f32 %v164, %v165
    %v167 = vmul.f32 %v130, %v116
    %v168 = vmul.f32 %v141, %v119
    %v169 = vadd.f32 %v167, %v168
    %v170 = vmul.f32 %v131, %v119
    %v171 = vmul.f32 %v142, %v122
    %v172 = vadd.f32 %v170, %v171
    %v173 = vmul.f32 %v88, 0.5
    %v174 = vsub.f32 %v173, 0.5
    %v175 = vsub.f32 %v173, 1.0
    %v176 = vsub.f32 %v173, 1.5
    %v177 = vsub.f32 %v173, 2.0
    %v178 = vsub.f32 %v173, 2.5
    %v179 = vsub.f32 %v173, 3.0
    %v180 = vsub.f32 %v173, 3.5
    %v181 = vsub.f32 %v173, 4.0
    %v182 = vsub.f32 %v173, 4.5
    %v183 = vsub.f32 1.0, %v174
    %v184 = vsub.f32 1.0, %v175
    %v185 = vsub.f32 1.0, %v176
    %v186 = vsub.f32 1.0, %v177
    %v187 = vsub.f32 1.0, %v178
    %v188 = vsub.f32 1.0, %v179
    %v189 = vsub.f32 1.0, %v180
    %v190 = vsub.f32 1.0, %v181
    %v191 = vsub.f32 1.0, %v182
    %v192 = vmul.f32 %v173, %v145
    %v193 = vmul.f32 %v183, %v148
    %v194 = vadd.f32 %v192, %v193
    %v195 = vmul.f32 %v174, %v148
    %v196 = vmul.f32 %v184, %v151
    %v197 = vadd.f32 %v195, %v196
    %v198 = vmul.f32 %v175, %v151
    %v199 = vmul.f32 %v185, %v154
    %v200 = vadd.f32 %v198, %v199
    %v201 = vmul.f32 %v176, %v154
    %v202 = vmul.f32 %v186, %v157
    %v203 = vadd.f32 %v201, %v202
    %v204 = vmul.f32 %v177, %v157
    %v205 = vmul.f32 %v187, %v160
    %v206 = vadd.f32 %v204, %v205
    %v207 = vmul.f32 %v178, %v160
    %v208 = vmul.f32 %v188, %v163
    %v209 = vadd.f32 %v207, %v208
    %v210 = vmul.f32 %v179, %v163
    %v211 = vmul.f32 %v189, %v166
    %v212 = vadd.f32 %v210, %v211
    %v213 = vmul.f32 %v180, %v166
    %v214 = vmul.f32 %v190, %v169
    %v215 = vadd.f32 %v213, %v214
    %v216 = vmul.f32 %v181, %v169
    %v217 = vmul.f32 %v191, %v172
    %v218 = vadd.f32 %v216, %v217
    %v219 = vmul.f32 %v88, 0.33333334
    %v220 = vsub.f32 %v219, 0.33333334
    %v221 = vsub.f32 %v219, 0.6666667
    %v222 = vsub.f32 %v219, 1.0
    %v223 = vsub.f32 %v219, 1.3333334
    %v224 = vsub.f32 %v219, 1.6666666
    %v225 = vsub.f32 %v219, 2.0
    %v226 = vsub.f32 %v219, 2.3333333
    %v227 = vsub.f32 %v219, 2.6666667
    %v228 = vsub.f32 1.0, %v220
    %v229 = vsub.f32 1.0, %v221
    %v230 = vsub.f32 1.0, %v222
    %v231 = vsub.f32 1.0, %v223
    %v232 = vsub.f32 1.0, %v224
    %v233 = vsub.f32 1.0, %v225
    %v234 = vsub.f32 1.0, %v226
    %v235 = vsub.f32 1.0, %v227
    %v236 = vmul.f32 %v219, %v194
    %v237 = vmul.f32 %v228, %v197
    %v238 = vadd.f32 %v236, %v237
    %v239 = vmul.f32 %v220, %v197
    %v240 = vmul.f32 %v229, %v200
    %v241 = vadd.f32 %v239, %v240
    %v242 = vmul.f32 %v221, %v200
    %v243 = vmul.f32 %v230, %v203
    %v244 = vadd.f32 %v242, %v243
    %v245 = vmul.f32 %v222, %v203
    %v246 = vmul.f32 %v231, %v206
    %v247 = vadd.f32 %v245, %v246
    %v248 = vmul.f32 %v223, %v206
    %v249 = vmul.f32 %v232, %v209
    %v250 = vadd.f32 %v248, %v249
    %v251 = vmul.f32 %v224, %v209
    %v252 = vmul.f32 %v233, %v212
    %v253 = vadd.f32 %v251, %v252
    %v254 = vmul.f32 %v225, %v212
    %v255 = vmul.f32 %v234, %v215
    %v256 = vadd.f32 %v254, %v255
    %v257 = vmul.f32 %v226, %v215
    %v258 = vmul.f32 %v235, %v218
    %v259 = vadd.f32 %v257, %v258
    %v260 = vstv %s39
    %v261 = vmul.f32 %v260, %v238
    %v262 = vadd.f32 %v80, %v261
    %v263 = vstv %s40
    %v264 = vmul.f32 %v263, %v241
    %v265 = vadd.f32 %v262, %v264
    %v266 = vstv %s41
    %v267 = vmul.f32 %v266, %v244
    %v268 = vadd.f32 %v265, %v267
    %v269 = vstv %s42
    %v270 = vmul.f32 %v269, %v247
    %v271 = vadd.f32 %v268, %v270
    %v272 = vstv %s43
    %v273 = vmul.f32 %v272, %v250
    %v274 = vadd.f32 %v271, %v273
    %v275 = vstv %s44
    %v276 = vmul.f32 %v275, %v253
    %v277 = vadd.f32 %v274, %v276
    %v278 = vstv %s45
    %v279 = vmul.f32 %v278, %v256
    %v280 = vadd.f32 %v277, %v279
    %v281 = vstv %s46
    %v282 = vmul.f32 %v281, %v259
    %v283 = vadd.f32 %v280, %v282
    %v284 = vstv %s47
    %v285 = vmul.f32 %v284, %v238
    %v286 = vadd.f32 %v82, %v285
    %v287 = vstv %s48
    %v288 = vmul.f32 %v287, %v241
    %v289 = vadd.f32 %v286, %v288
    %v290 = vstv %s49
    %v291 = vmul.f32 %v290, %v244
    %v292 = vadd.f32 %v289, %v291
    %v293 = vstv %s50
    %v294 = vmul.f32 %v293, %v247
    %v295 = vadd.f32 %v292, %v294
    %v296 = vstv %s51
    %v297 = vmul.f32 %v296, %v250
    %v298 = vadd.f32 %v295, %v297
    %v299 = vstv %s52
    %v300 = vmul.f32 %v299, %v253
    %v301 = vadd.f32 %v298, %v300
    %v302 = vstv %s53
    %v303 = vmul.f32 %v302, %v256
    %v304 = vadd.f32 %v301, %v303
    %v305 = vstv %s54
    %v306 = vmul.f32 %v305, %v259
    %v307 = vadd.f32 %v304, %v306
    %v308 = vstv %s55
    %v309 = vmul.f32 %v308, %v238
    %v310 = vadd.f32 %v84, %v309
    %v311 = vstv %s56
    %v312 = vmul.f32 %v311, %v241
    %v313 = vadd.f32 %v310, %v312
    %v314 = vstv %s57
    %v315 = vmul.f32 %v314, %v244
    %v316 = vadd.f32 %v313, %v315
    %v317 = vstv %s58
    %v318 = vmul.f32 %v317, %v247
    %v319 = vadd.f32 %v316, %v318
    %v320 = vstv %s59
    %v321 = vmul.f32 %v320, %v250
    %v322 = vadd.f32 %v319, %v321
    %v323 = vstv %s60
    %v324 = vmul.f32 %v323, %v253
    %v325 = vadd.f32 %v322, %v324
    %v326 = vstv %s61
    %v327 = vmul.f32 %v326, %v256
    %v328 = vadd.f32 %v325, %v327
    %v329 = vstv %s62
    %v330 = vmul.f32 %v329, %v259
    %v331 = vadd.f32 %v328, %v330
    %v332 = vstv %s63
    %v333 = vmul.f32 %v332, %v238
    %v334 = vadd.f32 %v86, %v333
    %v335 = vstv %s64
    %v336 = vmul.f32 %v335, %v241
    %v337 = vadd.f32 %v334, %v336
    %v338 = vstv %s65
    %v339 = vmul.f32 %v338, %v244
    %v340 = vadd.f32 %v337, %v339
    %v341 = vstv %s66
    %v342 = vmul.f32 %v341, %v247
    %v343 = vadd.f32 %v340, %v342
    %v344 = vstv %s67
    %v345 = vmul.f32 %v344, %v250
    %v346 = vadd.f32 %v343, %v345
    %v347 = vstv %s68
    %v348 = vmul.f32 %v347, %v253
    %v349 = vadd.f32 %v346, %v348
    %v350 = vstv %s69
    %v351 = vmul.f32 %v350, %v256
    %v352 = vadd.f32 %v349, %v351
    %v353 = vstv %s70
    %v354 = vmul.f32 %v353, %v259
    %v355 = vadd.f32 %v352, %v354
    %356 = vst [vmem:[#allocation7] sm:$0xff] %v283
    %s357 = scalar_lea.vmem [#allocation7], 8
    %358 = vst [vmem:[%s357] sm:$0xff] %v307
    %s359 = scalar_lea.vmem [#allocation7], 16
    %360 = vst [vmem:[%s359] sm:$0xff] %v331
    %s361 = scalar_lea.vmem [#allocation7], 24
    %362 = vst [vmem:[%s361] sm:$0xff] %v355
    // Predicated region
    $region18: #{tpu_custom_call.1} parent=1 // pred_check
      _
    $region19: #{tpu_custom_call.1} parent=1 // pred_check_branch
      %364 = sbr.rel (0) target = $region21
    $region20: #{tpu_custom_call.1} parent=1 // pred_region
      %s366 = ssub.s32 512, 512
      %367 = vsyncadd [#allocation4], %s366
      %s368 = sshll.u32 [#allocation7], 4
      %s369 = int_to_ptr.vmem [resolvable:$true] %s368
      %374 = dma.vmem_to_hbm [thread:$0]  %s369, 512, %s2, [#allocation4], 128, 128, 8
    $region21: #{tpu_custom_call.1} parent=1 // pred_fallthru
      _
    // Predicated region
    $region22: #{tpu_custom_call.1} parent=1 // pred_check
      _
    $region23: #{tpu_custom_call.1} parent=1 // pred_check_branch
      %376 = sbr.rel (0) target = $region25
    $region24: #{tpu_custom_call.1} parent=1 // pred_region
      %377 = dma.done [#allocation4], 512
    $region25: #{tpu_custom_call.1} parent=1 // pred_fallthru
      _
    %378 = vsyncpa [#allocation3], 1
    %379 = vsyncpa [#allocation4], 1
    %380 = vsyncpa [#allocation5], 1

</llo_original>
